<compile_context>
chip_gen: v7x
topology: tpu7x:2x2x1
jax: 0.10.0
libtpu: 0.0.40
codegen_flags: <defaults>
</compile_context>

<pallas_src>
import functools
import math

import jax
import jax.numpy as jnp
from jax import lax
from jax.experimental import pallas as pl
from jax.experimental.pallas import tpu as pltpu


def _cdiv(a, b):
    return -(-a // b)


def _round_up(x, m):
    return ((x + m - 1) // m) * m


def _ssq_kernel_single(x_ref, y_ref, o_ref):
    """Whole (row-tile, cols) block in one shot: no scratch, no mask."""
    d = x_ref[...].astype(jnp.float32) - y_ref[...].astype(jnp.float32)
    o_ref[...] = jnp.sum(d * d, axis=1, keepdims=True)


def _ssq_kernel_tiled(x_ref, y_ref, o_ref, acc_ref, *, cols, tile_d,
                      nk_per_split, needs_mask):
    """Lane-tiled reduction with a resident VMEM accumulator.

    Grid: (n_split, n_row_tiles, nk_per_split); axis 2 is the reduction.
    """
    k = pl.program_id(2)

    @pl.when(k == 0)
    def _():
        acc_ref[...] = jnp.zeros_like(acc_ref)

    # In-kernel upcast: inputs are streamed from HBM at native dtype.
    d = x_ref[...].astype(jnp.float32) - y_ref[...].astype(jnp.float32)
    dd = d * d
    if needs_mask:
        # Zero out-of-range lanes (array tail and/or fully-OOB tiles of the
        # ragged megacore split) BEFORE accumulating — edge-block bytes are
        # unspecified. Pure VPU (iota + compare + select); plenty of slack.
        gk = pl.program_id(0) * nk_per_split + k
        col = gk * tile_d + lax.broadcasted_iota(jnp.int32, dd.shape, 1)
        dd = jnp.where(col < cols, dd, 0.0)
    acc_ref[...] += dd  # lane-resident partials: pure VPU in the hot loop

    @pl.when(k == nk_per_split - 1)
    def _():
        # single cross-lane (XLU) reduce per row tile, outside the hot loop
        o_ref[...] = jnp.sum(acc_ref[...], axis=1, keepdims=True)[None]


def psnr(input_tensor, target_tensor, *, max_block_elems=1024 * 1024):
    B = int(input_tensor.shape[0])
    D = 1
    for s in input_tensor.shape[1:]:
        D *= int(s)

    x = input_tensor.reshape(B, D)
    y = target_tensor.reshape(B, D)

    # Copy-free sublane densification: split each batch row into r sub-rows
    # only when it is a pure reshape (no pad, no extra HBM round trip).
    r = 8 // math.gcd(B, 8)
    if r > 1 and D % r == 0:
        rows, cols = B * r, D // r
        x = x.reshape(rows, cols)
        y = y.reshape(rows, cols)
    else:
        r = 1
        rows, cols = B, D

    # Row tiling: whole row axis if small (full-dim block is legal for any
    # size), else 256-row tiles; a ragged tail block only produces garbage in
    # padded output rows, which are sliced off below.
    tile_r = rows if rows <= 256 else 256
    n_r = _cdiv(rows, tile_r)
    rows_padded = n_r * tile_r
    pad_r = _round_up(tile_r, 8)  # sublane-padded VMEM footprint of a block

    if pad_r * cols <= max_block_elems:
        # ---- single lane tile per row tile: scratch-free fast path ----
        out = pl.pallas_call(
            _ssq_kernel_single,
            out_shape=jax.ShapeDtypeStruct((rows_padded, 1), jnp.float32),
            grid_spec=pltpu.PrefetchScalarGridSpec(
                num_scalar_prefetch=0,
                grid=(n_r,),
                in_specs=[
                    pl.BlockSpec((tile_r, cols), lambda i: (i, 0)),
                    pl.BlockSpec((tile_r, cols), lambda i: (i, 0)),
                ],
                out_specs=pl.BlockSpec((tile_r, 1), lambda i: (i, 0)),
            ),
            compiler_params=pltpu.CompilerParams(
                dimension_semantics=("parallel",),
                vmem_limit_bytes=48 * 1024 * 1024,
            ),
        )(x, y)
        ssq_rows = out[:rows, 0]
    else:
        # ---- lane-tiled reduction with resident accumulator ----
        tile_d = max(128, (max_block_elems // pad_r) // 128 * 128)
        tile_d = min(tile_d, _round_up(cols, 128))  # overshoot <= 127 lanes
        nk_total = _cdiv(cols, tile_d)

        # Megacore: if there is only one row tile, split the reduction range
        # across two "parallel" blocks so both v7x TensorCores get work
        # (measured-neutral on single-TC v5e/v6e).
        n_split = 2 if (n_r == 1 and nk_total >= 2) else 1
        nk_per_split = _cdiv(nk_total, n_split)
        needs_mask = (n_split * nk_per_split * tile_d) > cols
        last_blk = nk_total - 1

        def lane_idx(s, k):
            # Clamp fully out-of-range tiles of the ragged split back in
            # bounds; the in-kernel mask zeroes their contribution.
            return jnp.minimum(s * nk_per_split + k, last_blk)

        kern = functools.partial(
            _ssq_kernel_tiled, cols=cols, tile_d=tile_d,
            nk_per_split=nk_per_split, needs_mask=needs_mask)

        out = pl.pallas_call(
            kern,
            out_shape=jax.ShapeDtypeStruct((n_split, rows_padded, 1),
                                           jnp.float32),
            grid_spec=pltpu.PrefetchScalarGridSpec(
                num_scalar_prefetch=0,
                grid=(n_split, n_r, nk_per_split),
                in_specs=[
                    pl.BlockSpec((tile_r, tile_d),
                                 lambda s, i, k: (i, lane_idx(s, k))),
                    pl.BlockSpec((tile_r, tile_d),
                                 lambda s, i, k: (i, lane_idx(s, k))),
                ],
                out_specs=pl.BlockSpec((1, tile_r, 1),
                                       lambda s, i, k: (s, i, 0)),
                scratch_shapes=[pltpu.VMEM((tile_r, tile_d), jnp.float32)],
            ),
            compiler_params=pltpu.CompilerParams(
                dimension_semantics=("parallel", "parallel", "arbitrary"),
                vmem_limit_bytes=48 * 1024 * 1024,
            ),
        )(x, y)
        ssq_rows = jnp.sum(out[:, :rows, 0], axis=0)

    # Combine the r sub-row partials per batch; finish with -10*log10(mse)
    # (== 10*log10(1/mse); +inf when mse == 0, matching torch).
    ssq = ssq_rows.reshape(B, r).sum(axis=1) if r > 1 else ssq_rows
    mse = ssq / jnp.float32(D)
    return jnp.float32(-10.0) * jnp.log10(mse)


if __name__ == "__main__":
    key = jax.random.PRNGKey(0)
    k1, k2, k3, k4 = jax.random.split(key, 4)

    # Primary shapes implied by the module: (B, C, H, W)
    B, C, H, W = 2, 4, 16, 16
    x = jax.random.uniform(k1, (B, C, H, W), dtype=jnp.float32)
    t = jax.random.uniform(k2, (B, C, H, W), dtype=jnp.float32)

    result = psnr(x, t)
    jax.block_until_ready(result)

    mse_ref = jnp.mean((x - t).reshape(B, -1) ** 2, axis=1)
    ref = 10.0 * jnp.log10(1.0 / mse_ref)
    assert result.shape == (B,), result.shape
    assert jnp.allclose(result, ref, rtol=1e-5, atol=1e-5), (result, ref)

    # Secondary check: non-128-aligned D, tiled lane axis with in-kernel tail
    # masking and the megacore reduction split (forced via a tiny block budget).
    x2 = jax.random.uniform(k3, (3, 3, 25, 74), dtype=jnp.float32)  # D = 5550
    t2 = jax.random.uniform(k4, (3, 3, 25, 74), dtype=jnp.float32)
    res2 = psnr(x2, t2, max_block_elems=2048)
    jax.block_until_ready(res2)
    mse2 = jnp.mean((x2 - t2).reshape(3, -1) ** 2, axis=1)
    ref2 = 10.0 * jnp.log10(1.0 / mse2)
    assert jnp.allclose(res2, ref2, rtol=1e-5, atol=1e-5), (res2, ref2)

    print("KERNEL_OK")
</pallas_src>

<mosaic_0001>
module attributes {stable_mosaic.version = 11 : i64} {
  func.func @_ssq_kernel_single(%arg0: i32, %arg1: memref<8x256xf32, #tpu.memory_space<vmem>>, %arg2: memref<8x256xf32, #tpu.memory_space<vmem>>, %arg3: memref<8x1xf32, #tpu.memory_space<vmem>>) attributes {dimension_semantics = [#tpu.dimension_semantics<parallel>], iteration_bounds = array<i64: 1>, scalar_prefetch = 0 : i64, scratch_operands = 0 : i64, tpu.core_type = #tpu.core_type<tc>, window_params = [{transform_indices = @transform_0, window_bounds = array<i64: 8, 256>}, {transform_indices = @transform_1, window_bounds = array<i64: 8, 256>}, {transform_indices = @transform_2, window_bounds = array<i64: 8, 1>}]} {
    %c0 = arith.constant 0 : index
    %c0_0 = arith.constant 0 : index
    %0 = vector.load %arg1[%c0, %c0_0] : memref<8x256xf32, #tpu.memory_space<vmem>>, vector<8x256xf32>
    %c0_1 = arith.constant 0 : index
    %c0_2 = arith.constant 0 : index
    %1 = vector.load %arg2[%c0_1, %c0_2] : memref<8x256xf32, #tpu.memory_space<vmem>>, vector<8x256xf32>
    %2 = arith.subf %0, %1 : vector<8x256xf32>
    %3 = arith.mulf %2, %2 : vector<8x256xf32>
    %cst = arith.constant dense<0.000000e+00> : vector<8xf32>
    %4 = vector.multi_reduction <add>, %3, %cst [1] : vector<8x256xf32> to vector<8xf32>
    %5 = vector.shape_cast %4 : vector<8xf32> to vector<8x1xf32>
    %c0_3 = arith.constant 0 : index
    %c0_4 = arith.constant 0 : index
    %6 = vector.load %arg3[%c0_3, %c0_4] : memref<8x1xf32, #tpu.memory_space<vmem>>, vector<8x1xf32>
    tpu.vector_store %arg3[%c0_3, %c0_4], %5 {strides = array<i32>} : memref<8x1xf32, #tpu.memory_space<vmem>>, vector<8x1xf32>,
    return
  }
  func.func @transform_0(%arg0: i32) -> (i32, i32) {
    %c0_i32 = arith.constant 0 : i32
    %c0_i32_0 = arith.constant 0 : i32
    return %arg0, %c0_i32 : i32, i32
  }
  func.func @transform_1(%arg0: i32) -> (i32, i32) {
    %c0_i32 = arith.constant 0 : i32
    %c0_i32_0 = arith.constant 0 : i32
    return %arg0, %c0_i32 : i32, i32
  }
  func.func @transform_2(%arg0: i32) -> (i32, i32) {
    %c0_i32 = arith.constant 0 : i32
    %c0_i32_0 = arith.constant 0 : i32
    return %arg0, %c0_i32 : i32, i32
  }
}

</mosaic_0001>

<llo_original>
// kernel: tpu_custom_call.1
$region0: #{tpu_custom_call.1}
  #allocation0 [shape = 'u32[]', space=smem, size = 0x4, offset = 0x4, fixed_abs, tag = 'smem constant byte address 0x4 - core index']
  #allocation1 [shape = 'u32[144,128]{1,0:T(1,128)}', space=vmem, size = 0x12000, scoped, tag = 'internal scratch']
  %s0 = inlined_call_operand.hbm [shape: f32[8,256], index: 0, kind: input, shape index: {}]
  %s1 = inlined_call_operand.hbm [shape: f32[8,256], index: 1, kind: input, shape index: {}]
  %s2 = inlined_call_operand.vmem [shape: f32[8,1], index: 2, kind: output, shape index: {}]
  %s3 = sld [smem:[#allocation0]]
  $region26: #{tpu_custom_call.1} parent=0
    _
  %s5 = ssub.s32 1, %s3
  %s6 = scalar_select 0, %s5, %s3
  $region1: #{tpu_custom_call.1} parent=0
    #allocation2 [shape = 'u8[8192]{0}', space=vmem, size = 0x2000, scoped, tag = 'input window, operand 0, single buffered']
    #allocation3 [shape = 's32[1]{0}', space=sflag, size = 0x4, scoped, tag = 'scoped memory for tpu_custom_call.1']
    #allocation4 [shape = 'u8[8192]{0}', space=vmem, size = 0x2000, scoped, tag = 'input window, operand 1, single buffered']
    #allocation5 [shape = 's32[1]{0}', space=sflag, size = 0x4, scoped, tag = 'scoped memory for tpu_custom_call.1']
    %7 = vsyncpa [#allocation3], 0
    %8 = vsyncpa [#allocation5], 0
    // Predicated region
    $region2: #{tpu_custom_call.1} parent=1 // pred_check
      _
    $region3: #{tpu_custom_call.1} parent=1 // pred_check_branch
      %10 = sbr.rel (0) target = $region5
    $region4: #{tpu_custom_call.1} parent=1 // pred_region
      %s12 = ssub.s32 256, 256
      %13 = vsyncadd [#allocation3], %s12
      %s15 = sshll.u32 [#allocation2], 4
      %s16 = int_to_ptr.vmem [resolvable:$true] %s15
      %18 = dma.hbm_to_vmem [thread:$0]  %s0, 256, %s16, [#allocation3]
    $region5: #{tpu_custom_call.1} parent=1 // pred_fallthru
      _
    // Predicated region
    $region6: #{tpu_custom_call.1} parent=1 // pred_check
      _
    $region7: #{tpu_custom_call.1} parent=1 // pred_check_branch
      %20 = sbr.rel (0) target = $region9
    $region8: #{tpu_custom_call.1} parent=1 // pred_region
      %s22 = ssub.s32 256, 256
      %23 = vsyncadd [#allocation5], %s22
      %s25 = sshll.u32 [#allocation4], 4
      %s26 = int_to_ptr.vmem [resolvable:$true] %s25
      %28 = dma.hbm_to_vmem [thread:$0]  %s1, 256, %s26, [#allocation5]
    $region9: #{tpu_custom_call.1} parent=1 // pred_fallthru
      _
    // Predicated region
    $region10: #{tpu_custom_call.1} parent=1 // pred_check
      _
    $region11: #{tpu_custom_call.1} parent=1 // pred_check_branch
      %30 = sbr.rel (0) target = $region13
    $region12: #{tpu_custom_call.1} parent=1 // pred_region
      %31 = dma.done [#allocation3], 256
    $region13: #{tpu_custom_call.1} parent=1 // pred_fallthru
      _
    // Predicated region
    $region14: #{tpu_custom_call.1} parent=1 // pred_check
      _
    $region15: #{tpu_custom_call.1} parent=1 // pred_check_branch
      %33 = sbr.rel (0) target = $region17
    $region16: #{tpu_custom_call.1} parent=1 // pred_region
      %34 = dma.done [#allocation5], 256
    $region17: #{tpu_custom_call.1} parent=1 // pred_fallthru
      _
    %v35 = vld [vmem:[#allocation2] sm:$0xff]
    %v36 = vld [vmem:[#allocation2 + $0x8] sm:$0xff]
    %v37 = vld [vmem:[#allocation4] sm:$0xff]
    %v38 = vld [vmem:[#allocation4 + $0x8] sm:$0xff]
    %v39 = vsub.f32 %v35, %v37
    %v40 = vsub.f32 %v36, %v38
    %v41 = vmul.f32 %v39, %v39
    %v42 = vmul.f32 %v40, %v40
    %v43 = vadd.f32 %v41, %v42
    %44 = vadd.xlane.f32.xlu0 %v43
    %v45 = vpop.xlane.xlu0 %44
    %vm46 = vcmask 7168
    %47 = vst.msk [vmem:[%s2] sm:$0xff] %vm46, %v45
    // Predicated region
    $region18: #{tpu_custom_call.1} parent=1 // pred_check
      _
    $region19: #{tpu_custom_call.1} parent=1 // pred_check_branch
      %49 = sbr.rel (0) target = $region21
    $region20: #{tpu_custom_call.1} parent=1 // pred_region
      _
    $region21: #{tpu_custom_call.1} parent=1 // pred_fallthru
      _
    // Predicated region
    $region22: #{tpu_custom_call.1} parent=1 // pred_check
      _
    $region23: #{tpu_custom_call.1} parent=1 // pred_check_branch
      %51 = sbr.rel (0) target = $region25
    $region24: #{tpu_custom_call.1} parent=1 // pred_region
      _
    $region25: #{tpu_custom_call.1} parent=1 // pred_fallthru
      _
    %52 = vsyncpa [#allocation3], 1
    %53 = vsyncpa [#allocation5], 1

</llo_original>
